<compile_context>
chip_gen: v7x
topology: tpu7x:2x2x1
jax: 0.10.0
libtpu: 0.0.40
codegen_flags: <defaults>
</compile_context>

<pallas_src>
import math
import numpy as np
import jax
import jax.numpy as jnp
from jax.experimental import pallas as pl
from jax.experimental.pallas import tpu as pltpu

# Problem sizes (synthetic, small).
N = 2
C, H, W = 4, 16, 16
HP, WP = H // 2, W // 2          # pooled spatial size
KH = KW = 3                      # conv kernel
LW = N * C * W                   # packed lane width at full resolution  (128)
LP = N * C * WP                  # packed lane width at pooled resolution (64)


# ------------------------- constant matrices (host) -------------------------

def _bilinear_matrix(out_size, in_size):
    """PyTorch Upsample(mode='bilinear', align_corners=False) as a dense matrix."""
    m = np.zeros((out_size, in_size), dtype=np.float32)
    scale = in_size / out_size
    for o in range(out_size):
        src = (o + 0.5) * scale - 0.5
        x0 = int(math.floor(src))
        lam = src - x0
        i0 = min(max(x0, 0), in_size - 1)
        i1 = min(max(x0 + 1, 0), in_size - 1)
        m[o, i0] += 1.0 - lam
        m[o, i1] += lam
    return m


def build_static_constants():
    """Weight-independent constants.

    Returns:
      const_slab : (160, 128) f32, lane-dense packing of
                     rows   0: 16, lanes 0:16  -> scat   (row-pair selector, stacked)
                     rows  16:144, lanes 0:128 -> tcat   (col-pair selector, stacked)
                     rows 144:160, lanes 0:24  -> urs_cat (uh @ rsh[dy], lane-concat)
      lrow, cmask, uwb : pieces used by the host-side weight expansion
      uh, uw           : bilinear matrices (for the pure-JAX reference)
    """
    # Row-pair selection for the max pool, stacked: rows 0:8 pick row 2i, 8:16 pick 2i+1.
    scat = np.zeros((H, H), np.float32)
    for i in range(HP):
        scat[i, 2 * i] = 1.0
        scat[HP + i, 2 * i + 1] = 1.0

    # Column-pair selection (block-diagonal over the (n,c) lane blocks), stacked:
    # output lanes 0:64 pick the even column of each pair, lanes 64:128 the odd one.
    tcat = np.zeros((LW, LW), np.float32)
    for b in range(N * C):
        for xp in range(WP):
            tcat[b * W + 2 * xp, b * WP + xp] = 1.0
            tcat[b * W + 2 * xp + 1, LP + b * WP + xp] = 1.0

    # Conv row-shift matrices (zero padding at the vertical borders): (3, HP, HP).
    rsh = np.zeros((KH, HP, HP), np.float32)
    for dy in range(KH):
        for y in range(HP):
            ys = y + dy - 1
            if 0 <= ys < HP:
                rsh[dy, y, ys] = 1.0

    # Bilinear matrices.
    uh = _bilinear_matrix(H, HP)                               # (16, 8)  [Y, y]
    uw = _bilinear_matrix(W, WP)                               # (16, 8)  [X, x]

    # Height-upsample folded into the row shifts: urs[dy] = uh @ rsh[dy], lane-concat.
    urs_cat = np.concatenate([uh @ rsh[dy] for dy in range(KH)], axis=1)   # (16, 24)

    const_slab = np.zeros((H + LW + H, LW), np.float32)        # (160, 128)
    const_slab[0:H, 0:H] = scat
    const_slab[H:H + LW, :] = tcat
    const_slab[H + LW:H + LW + H, 0:KH * HP] = urs_cat

    # One-hot channel expansion over the packed pooled lane axis: lane p -> channel.
    lrow = np.zeros((LP, C), np.float32)
    for p in range(LP):
        lrow[p, (p // WP) % C] = 1.0

    # Conv column-shift masks: same batch block and x_src == x_dst + dx - 1
    # (zero padding at the horizontal borders): (3, LP, LP).
    cmask = np.zeros((KW, LP, LP), np.float32)
    for dx in range(KW):
        for p in range(LP):
            for q in range(LP):
                if (p // (C * WP) == q // (C * WP)) and (p % WP == q % WP + dx - 1):
                    cmask[dx, p, q] = 1.0

    # Width-upsample, block-diagonal over the (n, c) lane blocks: (LP, LW).
    uwb = np.zeros((LP, LW), np.float32)
    for b in range(N * C):
        uwb[b * WP:(b + 1) * WP, b * W:(b + 1) * W] = uw.T     # [x, X]

    return jnp.asarray(const_slab), lrow, cmask, uwb, uh, uw


def prepare_weight_params(weight, bias, lrow, cmask, uwb):
    """Host-side weight expansion (re-run only when weight/bias change).

    cmw_cat : (LP, KH*LW) = (64, 384); block dy holds
              ( sum_dx (lrow @ w[:, :, dy, dx].T @ lrow.T) * cmask[dx] ) @ uwb,
              i.e. channel-mix + horizontal shift + width upsample for kernel row dy.
    bias_row: (1, LW) bias expanded onto the packed lane axis.
    """
    w = np.asarray(weight, dtype=np.float32)                   # (Cout, Cin, 3, 3)
    b = np.asarray(bias, dtype=np.float32)                     # (C,)
    lrowt = lrow.T
    blocks = []
    for dy in range(KH):
        cmix = np.zeros((LP, LP), np.float32)
        for dx in range(KW):
            wk = w[:, :, dy, dx].T                             # (Cin, Cout)
            cmix += (lrow @ wk @ lrowt) * cmask[dx]
        blocks.append(cmix @ uwb)                              # (LP, LW)
    cmw_cat = np.concatenate(blocks, axis=1)                   # (64, 384)
    bias_row = b[(np.arange(LW) // W) % C].reshape(1, LW)      # (1, 128)
    return jnp.asarray(cmw_cat), jnp.asarray(bias_row)


# ------------------------------- Pallas kernel ------------------------------

def _res_unit_kernel(x_ref, c_ref, cmw_ref, b_ref, o_ref):
    f32 = jnp.float32
    x_slab = x_ref[...]                                        # (16, 128)

    scat = c_ref[0:H, 0:H]                                     # (16, 16)
    tcat = c_ref[H:H + LW, :]                                  # (128, 128)
    urs = c_ref[H + LW:H + LW + H, 0:KH * HP]                  # (16, 24)

    # ---- 2x2 max pool, stride 2 (2 MXU ops; the pair-max rides the VPU) ----
    r2 = jnp.dot(scat, x_slab, preferred_element_type=f32)     # (16, 128)
    r = jnp.maximum(r2[:HP, :], r2[HP:, :])                    # (8, 128) row-pair max
    pp = jnp.dot(r, tcat, preferred_element_type=f32)          # (8, 128)
    pooled = jnp.maximum(pp[:, :LP], pp[:, LP:])               # (8, 64)  col-pair max

    # ---- conv3x3(pad=1) + bilinear x2 upsample, fused into 2 MXU ops ----
    # Per kernel row dy: pooled @ cmw[dy] (channel mix + horiz shift + width
    # upsample), produced for all dy at once by one K=64 matmul.
    pcw = jnp.dot(pooled, cmw_ref[...], preferred_element_type=f32)        # (8, 384)
    # Re-stack the three vreg-aligned 128-lane blocks onto the sublane axis so the
    # row-combine + height upsample is a single (16,24)x(24,128) matmul.
    rhs = jnp.concatenate(
        [pcw[:, 0:LW], pcw[:, LW:2 * LW], pcw[:, 2 * LW:3 * LW]], axis=0)  # (24, 128)
    up = jnp.dot(urs, rhs, preferred_element_type=f32) + b_ref[...]        # (16, 128)

    # ---- sigmoid gate with the identity; full-lane unmasked (16, 128) store ----
    o_ref[...] = x_slab * jax.nn.sigmoid(up)


# --------------------------------- wrapper ----------------------------------

def res_unit_pallas(x, const_slab, cmw_cat, bias_row):
    # Lane-dense packing: (N, C, H, W) -> (H, N*C*W) = (16, 128).
    # TODO(synk): if the consumer accepts the packed (H, N*C*W) layout, drop this
    # transpose/reshape pair (and the inverse below) — their XLA copies cost about
    # as much as the kernel at this size.
    x_slab = x.transpose(2, 0, 1, 3).reshape(H, LW)

    vmem = pl.BlockSpec(memory_space=pltpu.MemorySpace.VMEM)
    out_slab = pl.pallas_call(
        _res_unit_kernel,
        out_shape=jax.ShapeDtypeStruct((H, LW), jnp.float32),
        in_specs=[vmem, vmem, vmem, vmem],
        out_specs=vmem,
    )(x_slab, const_slab, cmw_cat, bias_row)

    # (H, N*C*W) -> (N, C, H, W)
    return out_slab.reshape(H, N, C, W).transpose(1, 2, 0, 3)


# ------------------------------ pure-JAX reference ---------------------------

def res_unit_ref(x, weight, bias, up_h, up_w):
    pooled = jax.lax.reduce_window(
        x, -jnp.inf, jax.lax.max,
        window_dimensions=(1, 1, 2, 2), window_strides=(1, 1, 2, 2),
        padding="VALID")
    conv = jax.lax.conv_general_dilated(
        pooled, weight, window_strides=(1, 1), padding="SAME",
        dimension_numbers=("NCHW", "OIHW", "NCHW"))
    conv = conv + bias[None, :, None, None]
    up = jnp.einsum("Yy,ncyx,xX->ncYX", up_h, conv, up_w)
    return x * jax.nn.sigmoid(up)


# ----------------------------------- main ------------------------------------

if __name__ == "__main__":
    key = jax.random.PRNGKey(0)
    kx, kw, kb = jax.random.split(key, 3)

    x = jax.random.normal(kx, (N, C, H, W), dtype=jnp.float32)
    weight = jax.random.normal(kw, (C, C, KH, KW), dtype=jnp.float32) * 0.2
    bias = jax.random.normal(kb, (C,), dtype=jnp.float32) * 0.1

    const_slab, lrow, cmask, uwb, uh, uw = build_static_constants()
    cmw_cat, bias_row = prepare_weight_params(weight, bias, lrow, cmask, uwb)

    out = jax.block_until_ready(res_unit_pallas(x, const_slab, cmw_cat, bias_row))

    ref = jax.block_until_ready(
        res_unit_ref(x, weight, bias, jnp.asarray(uh), jnp.asarray(uw.T)))
    np.testing.assert_allclose(np.asarray(out), np.asarray(ref),
                               rtol=5e-4, atol=5e-5)

    print("KERNEL_OK")
</pallas_src>

<mosaic_0001>
module attributes {stable_mosaic.version = 11 : i64} {
  func.func @_res_unit_kernel(%arg0: memref<16x128xf32, #tpu.memory_space<vmem>>, %arg1: memref<160x128xf32, #tpu.memory_space<vmem>>, %arg2: memref<64x384xf32, #tpu.memory_space<vmem>>, %arg3: memref<1x128xf32, #tpu.memory_space<vmem>>, %arg4: memref<16x128xf32, #tpu.memory_space<vmem>>) attributes {dimension_semantics = [], scalar_prefetch = 0 : i64, scratch_operands = 0 : i64, tpu.core_type = #tpu.core_type<tc>} {
    %c0 = arith.constant 0 : index
    %c0_0 = arith.constant 0 : index
    %0 = vector.load %arg0[%c0, %c0_0] : memref<16x128xf32, #tpu.memory_space<vmem>>, vector<16x128xf32>
    %c0_1 = arith.constant 0 : index
    %c0_2 = arith.constant 0 : index
    %1 = vector.load %arg1[%c0_1, %c0_2] : memref<160x128xf32, #tpu.memory_space<vmem>>, vector<16x16xf32>
    %c16 = arith.constant 16 : index
    %c0_3 = arith.constant 0 : index
    %2 = vector.load %arg1[%c16, %c0_3] : memref<160x128xf32, #tpu.memory_space<vmem>>, vector<128x128xf32>
    %c144 = arith.constant 144 : index
    %c0_4 = arith.constant 0 : index
    %3 = vector.load %arg1[%c144, %c0_4] : memref<160x128xf32, #tpu.memory_space<vmem>>, vector<16x24xf32>
    %cst = arith.constant dense<0.000000e+00> : vector<16x128xf32>
    %4 = tpu.matmul %1, %0, %cst {dimension_numbers = #tpu.dot_dimension_numbers<[1], [0], [0], [1], [0, 0, 1, 1], [], []>} : vector<16x16xf32>, vector<16x128xf32>, vector<16x128xf32> -> vector<16x128xf32>
    %5 = vector.extract_strided_slice %4 {offsets = [0, 0], sizes = [8, 128], strides = [1, 1]} : vector<16x128xf32> to vector<8x128xf32>
    %6 = vector.extract_strided_slice %4 {offsets = [8, 0], sizes = [8, 128], strides = [1, 1]} : vector<16x128xf32> to vector<8x128xf32>
    %7 = arith.maximumf %5, %6 : vector<8x128xf32>
    %cst_5 = arith.constant dense<0.000000e+00> : vector<8x128xf32>
    %8 = tpu.matmul %7, %2, %cst_5 {dimension_numbers = #tpu.dot_dimension_numbers<[1], [0], [0], [1], [0, 0, 1, 1], [], []>} : vector<8x128xf32>, vector<128x128xf32>, vector<8x128xf32> -> vector<8x128xf32>
    %9 = vector.extract_strided_slice %8 {offsets = [0, 0], sizes = [8, 64], strides = [1, 1]} : vector<8x128xf32> to vector<8x64xf32>
    %10 = vector.extract_strided_slice %8 {offsets = [0, 64], sizes = [8, 64], strides = [1, 1]} : vector<8x128xf32> to vector<8x64xf32>
    %11 = arith.maximumf %9, %10 : vector<8x64xf32>
    %c0_6 = arith.constant 0 : index
    %c0_7 = arith.constant 0 : index
    %12 = vector.load %arg2[%c0_6, %c0_7] : memref<64x384xf32, #tpu.memory_space<vmem>>, vector<64x384xf32>
    %cst_8 = arith.constant dense<0.000000e+00> : vector<8x384xf32>
    %13 = tpu.matmul %11, %12, %cst_8 {dimension_numbers = #tpu.dot_dimension_numbers<[1], [0], [0], [1], [0, 0, 1, 1], [], []>} : vector<8x64xf32>, vector<64x384xf32>, vector<8x384xf32> -> vector<8x384xf32>
    %14 = vector.extract_strided_slice %13 {offsets = [0, 0], sizes = [8, 128], strides = [1, 1]} : vector<8x384xf32> to vector<8x128xf32>
    %15 = vector.extract_strided_slice %13 {offsets = [0, 128], sizes = [8, 128], strides = [1, 1]} : vector<8x384xf32> to vector<8x128xf32>
    %16 = vector.extract_strided_slice %13 {offsets = [0, 256], sizes = [8, 128], strides = [1, 1]} : vector<8x384xf32> to vector<8x128xf32>
    %17 = tpu.concatenate %14, %15, %16 in 0 : vector<8x128xf32>, vector<8x128xf32>, vector<8x128xf32> -> vector<24x128xf32>
    %cst_9 = arith.constant dense<0.000000e+00> : vector<16x128xf32>
    %18 = tpu.matmul %3, %17, %cst_9 {dimension_numbers = #tpu.dot_dimension_numbers<[1], [0], [0], [1], [0, 0, 1, 1], [], []>} : vector<16x24xf32>, vector<24x128xf32>, vector<16x128xf32> -> vector<16x128xf32>
    %c0_10 = arith.constant 0 : index
    %c0_11 = arith.constant 0 : index
    %19 = vector.load %arg3[%c0_10, %c0_11] : memref<1x128xf32, #tpu.memory_space<vmem>>, vector<1x128xf32>
    %20 = vector.broadcast %19 : vector<1x128xf32> to vector<16x128xf32>
    %21 = arith.addf %18, %20 : vector<16x128xf32>
    %22 = arith.negf %21 : vector<16x128xf32>
    %23 = math.exp %22 : vector<16x128xf32>
    %cst_12 = arith.constant 1.000000e+00 : f32
    %24 = vector.broadcast %cst_12 : f32 to vector<16x128xf32>
    %25 = arith.addf %24, %23 : vector<16x128xf32>
    %26 = arith.divf %24, %25 : vector<16x128xf32>
    %27 = arith.mulf %0, %26 : vector<16x128xf32>
    %c0_13 = arith.constant 0 : index
    %c0_14 = arith.constant 0 : index
    %28 = vector.load %arg4[%c0_13, %c0_14] : memref<16x128xf32, #tpu.memory_space<vmem>>, vector<16x128xf32>
    tpu.vector_store %arg4[%c0_13, %c0_14], %27 {strides = array<i32>} : memref<16x128xf32, #tpu.memory_space<vmem>>, vector<16x128xf32>,
    return
  }
}

</mosaic_0001>

<llo_original>
// kernel: tpu_custom_call.1
$region0: #{tpu_custom_call.1}
  #allocation0 [shape = 'u32[]', space=smem, size = 0x4, offset = 0x4, fixed_abs, tag = 'smem constant byte address 0x4 - core index']
  #allocation1 [shape = 'u32[144,128]{1,0:T(1,128)}', space=vmem, size = 0x12000, scoped, tag = 'internal scratch']
  %s0 = inlined_call_operand.hbm [shape: f32[16,128], index: 0, kind: input, shape index: {}]
  %s1 = inlined_call_operand.hbm [shape: f32[160,128], index: 1, kind: input, shape index: {}]
  %s2 = inlined_call_operand.hbm [shape: f32[64,384], index: 2, kind: input, shape index: {}]
  %s3 = inlined_call_operand.vmem [shape: f32[1,128], index: 3, kind: input, shape index: {}]
  %s4 = inlined_call_operand.hbm [shape: f32[16,128], index: 4, kind: output, shape index: {}]
  %s5 = sld [smem:[#allocation0]]
  $region38: #{tpu_custom_call.1} parent=0
    _
  %s7 = ssub.s32 1, %s5
  %s8 = scalar_select 0, %s7, %s5
  $region1: #{tpu_custom_call.1} parent=0
    #allocation2 [shape = 'u8[8192]{0}', space=vmem, size = 0x2000, scoped, tag = 'input window, operand 0, single buffered']
    #allocation3 [shape = 's32[1]{0}', space=sflag, size = 0x4, scoped, tag = 'scoped memory for tpu_custom_call.1']
    #allocation4 [shape = 's32[1]{0}', space=sflag, size = 0x4, scoped, tag = 'scoped memory for tpu_custom_call.1']
    #allocation5 [shape = 'u8[81920]{0}', space=vmem, size = 0x14000, scoped, tag = 'input window, operand 1, single buffered']
    #allocation6 [shape = 's32[1]{0}', space=sflag, size = 0x4, scoped, tag = 'scoped memory for tpu_custom_call.1']
    #allocation7 [shape = 'u8[98304]{0}', space=vmem, size = 0x18000, scoped, tag = 'input window, operand 2, single buffered']
    #allocation8 [shape = 'u8[8192]{0}', space=vmem, size = 0x2000, scoped, tag = 'output window, operand 0, single buffered']
    %9 = vsyncpa [#allocation3], 0
    %10 = vsyncpa [#allocation6], 0
    %11 = vsyncpa [#allocation4], 0
    // Predicated region
    $region2: #{tpu_custom_call.1} parent=1 // pred_check
      _
    $region3: #{tpu_custom_call.1} parent=1 // pred_check_branch
      %13 = sbr.rel (0) target = $region5
    $region4: #{tpu_custom_call.1} parent=1 // pred_region
      %s15 = ssub.s32 256, 256
      %16 = vsyncadd [#allocation3], %s15
      %s17 = sshll.u32 [#allocation2], 4
      %s18 = int_to_ptr.vmem [resolvable:$true] %s17
      %23 = dma.hbm_to_vmem [thread:$0]  %s0, 256, %s18, [#allocation3], 128, 128, 8
    $region5: #{tpu_custom_call.1} parent=1 // pred_fallthru
      _
    // Predicated region
    $region6: #{tpu_custom_call.1} parent=1 // pred_check
      _
    $region7: #{tpu_custom_call.1} parent=1 // pred_check_branch
      %25 = sbr.rel (0) target = $region9
    $region8: #{tpu_custom_call.1} parent=1 // pred_region
      %s27 = ssub.s32 2560, 2560
      %28 = vsyncadd [#allocation6], %s27
      %s29 = sshll.u32 [#allocation5], 4
      %s30 = int_to_ptr.vmem [resolvable:$true] %s29
      %35 = dma.hbm_to_vmem [thread:$0]  %s1, 2560, %s30, [#allocation6], 128, 128, 8
    $region9: #{tpu_custom_call.1} parent=1 // pred_fallthru
      _
    // Predicated region
    $region10: #{tpu_custom_call.1} parent=1 // pred_check
      _
    $region11: #{tpu_custom_call.1} parent=1 // pred_check_branch
      %37 = sbr.rel (0) target = $region13
    $region12: #{tpu_custom_call.1} parent=1 // pred_region
      %s39 = ssub.s32 3072, 3072
      %40 = vsyncadd [#allocation6], %s39
      %s41 = sshll.u32 [#allocation7], 4
      %s42 = int_to_ptr.vmem [resolvable:$true] %s41
      %47 = dma.hbm_to_vmem [thread:$0]  %s2, 3072, %s42, [#allocation6], 384, 384, 24
    $region13: #{tpu_custom_call.1} parent=1 // pred_fallthru
      _
    // Predicated region
    $region14: #{tpu_custom_call.1} parent=1 // pred_check
      _
    $region15: #{tpu_custom_call.1} parent=1 // pred_check_branch
      %49 = sbr.rel (0) target = $region17
    $region16: #{tpu_custom_call.1} parent=1 // pred_region
      _
    $region17: #{tpu_custom_call.1} parent=1 // pred_fallthru
      _
    // Predicated region
    $region18: #{tpu_custom_call.1} parent=1 // pred_check
      _
    $region19: #{tpu_custom_call.1} parent=1 // pred_check_branch
      %51 = sbr.rel (0) target = $region21
    $region20: #{tpu_custom_call.1} parent=1 // pred_region
      %52 = dma.done [#allocation3], 256
    $region21: #{tpu_custom_call.1} parent=1 // pred_fallthru
      _
    // Predicated region
    $region22: #{tpu_custom_call.1} parent=1 // pred_check
      _
    $region23: #{tpu_custom_call.1} parent=1 // pred_check_branch
      %54 = sbr.rel (0) target = $region25
    $region24: #{tpu_custom_call.1} parent=1 // pred_region
      %55 = dma.done [#allocation6], 2560
    $region25: #{tpu_custom_call.1} parent=1 // pred_fallthru
      _
    // Predicated region
    $region26: #{tpu_custom_call.1} parent=1 // pred_check
      _
    $region27: #{tpu_custom_call.1} parent=1 // pred_check_branch
      %57 = sbr.rel (0) target = $region29
    $region28: #{tpu_custom_call.1} parent=1 // pred_region
      %58 = dma.done [#allocation6], 3072
    $region29: #{tpu_custom_call.1} parent=1 // pred_fallthru
      _
    %v59 = vld [vmem:[#allocation2] sm:$0xff]
    %v60 = vld [vmem:[#allocation2 + $0x8] sm:$0xff]
    %v61 = vld [vmem:[#allocation5] sm:$0xff]
    %v62 = vld [vmem:[#allocation5 + $0x8] sm:$0xff]
    %v63 = vld [vmem:[#allocation5 + $0x10] sm:$0xff]
    %v64 = vld [vmem:[#allocation5 + $0x18] sm:$0xff]
    %v65 = vld [vmem:[#allocation5 + $0x20] sm:$0xff]
    %v66 = vld [vmem:[#allocation5 + $0x28] sm:$0xff]
    %v67 = vld [vmem:[#allocation5 + $0x30] sm:$0xff]
    %v68 = vld [vmem:[#allocation5 + $0x38] sm:$0xff]
    %v69 = vld [vmem:[#allocation5 + $0x40] sm:$0xff]
    %v70 = vld [vmem:[#allocation5 + $0x48] sm:$0xff]
    %v71 = vld [vmem:[#allocation5 + $0x50] sm:$0xff]
    %v72 = vld [vmem:[#allocation5 + $0x58] sm:$0xff]
    %v73 = vld [vmem:[#allocation5 + $0x60] sm:$0xff]
    %v74 = vld [vmem:[#allocation5 + $0x68] sm:$0xff]
    %v75 = vld [vmem:[#allocation5 + $0x70] sm:$0xff]
    %v76 = vld [vmem:[#allocation5 + $0x78] sm:$0xff]
    %v77 = vld [vmem:[#allocation5 + $0x80] sm:$0xff]
    %v78 = vld [vmem:[#allocation5 + $0x88] sm:$0xff]
    %v79 = vld [vmem:[#allocation5 + $0x90] sm:$0xff]
    %v80 = vld [vmem:[#allocation5 + $0x98] sm:$0xff]
    %vm81 = vcmask 130048
    %v83 = vsel %vm81, %v61, 0
    %v86 = vsel %vm81, %v62, 0
    %88 = vmatprep.subr.mxu0 0.0
    %89 = vmatpush1.msra.mxu0 %v59
    %90 = vmatprep.subr.mxu0 0.0
    %91 = vmatpush1.msra.mxu0 %v60
    %92 = vmatprep.subr.mxu0 0.0
    %93 = vmatpush1.msra.mxu0 0.0
    %94 = vmatprep.subr.mxu0 0.0
    %95 = vmatpush1.msra.mxu0 0.0
    %96 = vmatprep.subr.mxu0 0.0
    %97 = vmatpush1.msra.mxu0 0.0
    %98 = vmatprep.subr.mxu0 0.0
    %99 = vmatpush1.msra.mxu0 0.0
    %100 = vmatprep.subr.mxu0 0.0
    %101 = vmatpush1.msra.mxu0 0.0
    %102 = vmatprep.subr.mxu0 0.0
    %103 = vmatpush1.msra.mxu0 0.0
    %104 = vmatprep.subr.mxu0 0.0
    %105 = vmatpush1.msra.mxu0 0.0
    %106 = vmatprep.subr.mxu0 0.0
    %107 = vmatpush1.msra.mxu0 0.0
    %108 = vmatprep.subr.mxu0 0.0
    %109 = vmatpush1.msra.mxu0 0.0
    %110 = vmatprep.subr.mxu0 0.0
    %111 = vmatpush1.msra.mxu0 0.0
    %112 = vmatprep.subr.mxu0 0.0
    %113 = vmatpush1.msra.mxu0 0.0
    %114 = vmatprep.subr.mxu0 0.0
    %115 = vmatpush1.msra.mxu0 0.0
    %116 = vmatprep.subr.mxu0 0.0
    %117 = vmatpush1.msra.mxu0 0.0
    %118 = vmatprep.subr.mxu0 0.0
    %119 = vmatpush1.msra.mxu0 0.0
    %120 = vmatprep.subr.mxu0 0.0
    %121 = vmatpush1.msra.mxu0 0.0
    %122 = vmatprep.subr.mxu0 0.0
    %123 = vmatpush1.msra.mxu0 0.0
    %124 = vmatprep.subr.mxu0 0.0
    %125 = vmatpush1.msra.mxu0 0.0
    %126 = vmatprep.subr.mxu0 0.0
    %127 = vmatpush1.msra.mxu0 0.0
    %128 = vmatprep.subr.mxu0 0.0
    %129 = vmatpush1.msra.mxu0 0.0
    %130 = vmatprep.subr.mxu0 0.0
    %131 = vmatpush1.msra.mxu0 0.0
    %132 = vmatprep.subr.mxu0 0.0
    %133 = vmatpush1.msra.mxu0 0.0
    %134 = vmatprep.subr.mxu0 0.0
    %135 = vmatpush1.msra.mxu0 0.0
    %136 = vmatprep.subr.mxu0 0.0
    %137 = vmatpush1.msra.mxu0 0.0
    %138 = vmatprep.subr.mxu0 0.0
    %139 = vmatpush1.msra.mxu0 0.0
    %140 = vmatprep.subr.mxu0 0.0
    %141 = vmatpush1.msra.mxu0 0.0
    %142 = vmatprep.subr.mxu0 0.0
    %143 = vmatpush1.msra.mxu0 0.0
    %144 = vmatprep.subr.mxu0 0.0
    %145 = vmatpush1.msra.mxu0 0.0
    %146 = vmatprep.subr.mxu0 0.0
    %147 = vmatpush1.msra.mxu0 0.0
    %148 = vmatprep.subr.mxu0 0.0
    %149 = vmatpush1.msra.mxu0 0.0
    %150 = vmatprep.subr.mxu0 0.0
    %151 = vmatpush1.msra.mxu0 0.0
    %152 = vmatprep.mubr.f32.mxu0 0.0
    %153 = vmatmul.mubr.f32.gmra.mrb[0].mxu0 %v83
    %v154 = vpop.f32.mrb[0].mxu0
    %v155 = vadd.f32 0.0, %v154
    %v156 = vpop.f32.mrb[0].mxu0
    %157 = vmatprep.mubr.f32.mxu0 0.0
    %158 = vmatmul.mubr.f32.gmra.mrb[0].mxu0 %v86
    %v159 = vpop.f32.mrb[0].mxu0
    %v160 = vadd.f32 0.0, %v159
    %v161 = vpop.f32.mrb[0].mxu0
    %162 = vdwg.mxu0
    %v163 = vmax.f32 %v155, %v160
    %164 = vmatprep.subr.mxu0 0.0
    %165 = vmatpush1.msra.mxu0 %v63
    %166 = vmatprep.subr.mxu0 0.0
    %167 = vmatpush1.msra.mxu0 %v64
    %168 = vmatprep.subr.mxu0 0.0
    %169 = vmatpush1.msra.mxu0 %v65
    %170 = vmatprep.subr.mxu0 0.0
    %171 = vmatpush1.msra.mxu0 %v66
    %172 = vmatprep.subr.mxu0 0.0
    %173 = vmatpush1.msra.mxu0 %v67
    %174 = vmatprep.subr.mxu0 0.0
    %175 = vmatpush1.msra.mxu0 %v68
    %176 = vmatprep.subr.mxu0 0.0
    %177 = vmatpush1.msra.mxu0 %v69
    %178 = vmatprep.subr.mxu0 0.0
    %179 = vmatpush1.msra.mxu0 %v70
    %180 = vmatprep.subr.mxu0 0.0
    %181 = vmatpush1.msra.mxu0 %v71
    %182 = vmatprep.subr.mxu0 0.0
    %183 = vmatpush1.msra.mxu0 %v72
    %184 = vmatprep.subr.mxu0 0.0
    %185 = vmatpush1.msra.mxu0 %v73
    %186 = vmatprep.subr.mxu0 0.0
    %187 = vmatpush1.msra.mxu0 %v74
    %188 = vmatprep.subr.mxu0 0.0
    %189 = vmatpush1.msra.mxu0 %v75
    %190 = vmatprep.subr.mxu0 0.0
    %191 = vmatpush1.msra.mxu0 %v76
    %192 = vmatprep.subr.mxu0 0.0
    %193 = vmatpush1.msra.mxu0 %v77
    %194 = vmatprep.subr.mxu0 0.0
    %195 = vmatpush1.msra.mxu0 %v78
    %196 = vmatprep.subr.mxu0 0.0
    %197 = vmatpush1.msra.mxu0 0.0
    %198 = vmatprep.subr.mxu0 0.0
    %199 = vmatpush1.msra.mxu0 0.0
    %200 = vmatprep.subr.mxu0 0.0
    %201 = vmatpush1.msra.mxu0 0.0
    %202 = vmatprep.subr.mxu0 0.0
    %203 = vmatpush1.msra.mxu0 0.0
    %204 = vmatprep.subr.mxu0 0.0
    %205 = vmatpush1.msra.mxu0 0.0
    %206 = vmatprep.subr.mxu0 0.0
    %207 = vmatpush1.msra.mxu0 0.0
    %208 = vmatprep.subr.mxu0 0.0
    %209 = vmatpush1.msra.mxu0 0.0
    %210 = vmatprep.subr.mxu0 0.0
    %211 = vmatpush1.msra.mxu0 0.0
    %212 = vmatprep.subr.mxu0 0.0
    %213 = vmatpush1.msra.mxu0 0.0
    %214 = vmatprep.subr.mxu0 0.0
    %215 = vmatpush1.msra.mxu0 0.0
    %216 = vmatprep.subr.mxu0 0.0
    %217 = vmatpush1.msra.mxu0 0.0
    %218 = vmatprep.subr.mxu0 0.0
    %219 = vmatpush1.msra.mxu0 0.0
    %220 = vmatprep.subr.mxu0 0.0
    %221 = vmatpush1.msra.mxu0 0.0
    %222 = vmatprep.subr.mxu0 0.0
    %223 = vmatpush1.msra.mxu0 0.0
    %224 = vmatprep.subr.mxu0 0.0
    %225 = vmatpush1.msra.mxu0 0.0
    %226 = vmatprep.subr.mxu0 0.0
    %227 = vmatpush1.msra.mxu0 0.0
    %228 = vmatprep.mubr.f32.mxu0 0.0
    %229 = vmatmul.mubr.f32.gmra.mrb[0].mxu0 %v163
    %v230 = vpop.f32.mrb[0].mxu0
    %v231 = vadd.f32 0.0, %v230
    %v232 = vpop.f32.mrb[0].mxu0
    %233 = vdwg.mxu0
    %235 = vrot.lane.b32.xlu0 %v231, 64
    %v236 = vpop.permute.xlu0 %235
    %v238 = vmax.f32 %v231, %v236
    %v239 = vld [vmem:[#allocation7] sm:$0xff]
    %v240 = vld [vmem:[#allocation7 + $0x8] sm:$0xff]
    %v241 = vld [vmem:[#allocation7 + $0x10] sm:$0xff]
    %v242 = vld [vmem:[#allocation7 + $0x18] sm:$0xff]
    %v243 = vld [vmem:[#allocation7 + $0x20] sm:$0xff]
    %v244 = vld [vmem:[#allocation7 + $0x28] sm:$0xff]
    %v245 = vld [vmem:[#allocation7 + $0x30] sm:$0xff]
    %v246 = vld [vmem:[#allocation7 + $0x38] sm:$0xff]
    %v247 = vld [vmem:[#allocation7 + $0x40] sm:$0xff]
    %v248 = vld [vmem:[#allocation7 + $0x48] sm:$0xff]
    %v249 = vld [vmem:[#allocation7 + $0x50] sm:$0xff]
    %v250 = vld [vmem:[#allocation7 + $0x58] sm:$0xff]
    %v251 = vld [vmem:[#allocation7 + $0x60] sm:$0xff]
    %v252 = vld [vmem:[#allocation7 + $0x68] sm:$0xff]
    %v253 = vld [vmem:[#allocation7 + $0x70] sm:$0xff]
    %v254 = vld [vmem:[#allocation7 + $0x78] sm:$0xff]
    %v255 = vld [vmem:[#allocation7 + $0x80] sm:$0xff]
    %v256 = vld [vmem:[#allocation7 + $0x88] sm:$0xff]
    %v257 = vld [vmem:[#allocation7 + $0x90] sm:$0xff]
    %v258 = vld [vmem:[#allocation7 + $0x98] sm:$0xff]
    %v259 = vld [vmem:[#allocation7 + $0xa0] sm:$0xff]
    %v260 = vld [vmem:[#allocation7 + $0xa8] sm:$0xff]
    %v261 = vld [vmem:[#allocation7 + $0xb0] sm:$0xff]
    %v262 = vld [vmem:[#allocation7 + $0xb8] sm:$0xff]
    %vm263 = vcmask 523264
    %v265 = vsel %vm263, %v238, 0
    %267 = vmatprep.subr.mxu0 %v240
    %268 = vmatpush1.msra.mxu0 %v239
    %269 = vmatprep.subr.mxu0 %v243
    %270 = vmatpush1.msra.mxu0 %v242
    %271 = vmatprep.subr.mxu0 %v246
    %272 = vmatpush1.msra.mxu0 %v245
    %273 = vmatprep.subr.mxu0 %v249
    %274 = vmatpush1.msra.mxu0 %v248
    %275 = vmatprep.subr.mxu0 %v252
    %276 = vmatpush1.msra.mxu0 %v251
    %277 = vmatprep.subr.mxu0 %v255
    %278 = vmatpush1.msra.mxu0 %v254
    %279 = vmatprep.subr.mxu0 %v258
    %280 = vmatpush1.msra.mxu0 %v257
    %281 = vmatprep.subr.mxu0 %v261
    %282 = vmatpush1.msra.mxu0 %v260
    %283 = vmatprep.subr.mxu0 0.0
    %284 = vmatpush1.msra.mxu0 0.0
    %285 = vmatprep.subr.mxu0 0.0
    %286 = vmatpush1.msra.mxu0 0.0
    %287 = vmatprep.subr.mxu0 0.0
    %288 = vmatpush1.msra.mxu0 0.0
    %289 = vmatprep.subr.mxu0 0.0
    %290 = vmatpush1.msra.mxu0 0.0
    %291 = vmatprep.subr.mxu0 0.0
    %292 = vmatpush1.msra.mxu0 0.0
    %293 = vmatprep.subr.mxu0 0.0
    %294 = vmatpush1.msra.mxu0 0.0
    %295 = vmatprep.subr.mxu0 0.0
    %296 = vmatpush1.msra.mxu0 0.0
    %297 = vmatprep.subr.mxu0 0.0
    %298 = vmatpush1.msra.mxu0 0.0
    %299 = vmatprep.subr.mxu0 0.0
    %300 = vmatpush1.msra.mxu0 0.0
    %301 = vmatprep.subr.mxu0 0.0
    %302 = vmatpush1.msra.mxu0 0.0
    %303 = vmatprep.subr.mxu0 0.0
    %304 = vmatpush1.msra.mxu0 0.0
    %305 = vmatprep.subr.mxu0 0.0
    %306 = vmatpush1.msra.mxu0 0.0
    %307 = vmatprep.subr.mxu0 0.0
    %308 = vmatpush1.msra.mxu0 0.0
    %309 = vmatprep.subr.mxu0 0.0
    %310 = vmatpush1.msra.mxu0 0.0
    %311 = vmatprep.subr.mxu0 0.0
    %312 = vmatpush1.msra.mxu0 0.0
    %313 = vmatprep.subr.mxu0 0.0
    %314 = vmatpush1.msra.mxu0 0.0
    %315 = vmatprep.subr.mxu0 0.0
    %316 = vmatpush1.msra.mxu0 0.0
    %317 = vmatprep.subr.mxu0 0.0
    %318 = vmatpush1.msra.mxu0 0.0
    %319 = vmatprep.subr.mxu0 0.0
    %320 = vmatpush1.msra.mxu0 0.0
    %321 = vmatprep.subr.mxu0 0.0
    %322 = vmatpush1.msra.mxu0 0.0
    %323 = vmatprep.subr.mxu0 0.0
    %324 = vmatpush1.msra.mxu0 0.0
    %325 = vmatprep.subr.mxu0 0.0
    %326 = vmatpush1.msra.mxu0 0.0
    %327 = vmatprep.subr.mxu0 0.0
    %328 = vmatpush1.msra.mxu0 0.0
    %329 = vmatprep.subr.mxu0 0.0
    %330 = vmatpush1.msra.mxu0 0.0
    %331 = vmatprep.mubr.f32.mxu0 0.0
    %332 = vmatmul.mubr.f32.gmra.mrb[0].mxu0 %v265
    %v333 = vpop.f32.mrb[0].mxu0
    %v334 = vadd.f32 0.0, %v333
    %v335 = vpop.f32.mrb[0].mxu0
    %v336 = vadd.f32 0.0, %v335
    %337 = vdwg.mxu0
    %338 = vmatprep.subr.mxu0 0.0
    %339 = vmatpush1.msra.mxu0 %v241
    %340 = vmatprep.subr.mxu0 0.0
    %341 = vmatpush1.msra.mxu0 %v244
    %342 = vmatprep.subr.mxu0 0.0
    %343 = vmatpush1.msra.mxu0 %v247
    %344 = vmatprep.subr.mxu0 0.0
    %345 = vmatpush1.msra.mxu0 %v250
    %346 = vmatprep.subr.mxu0 0.0
    %347 = vmatpush1.msra.mxu0 %v253
    %348 = vmatprep.subr.mxu0 0.0
    %349 = vmatpush1.msra.mxu0 %v256
    %350 = vmatprep.subr.mxu0 0.0
    %351 = vmatpush1.msra.mxu0 %v259
    %352 = vmatprep.subr.mxu0 0.0
    %353 = vmatpush1.msra.mxu0 %v262
    %354 = vmatprep.subr.mxu0 0.0
    %355 = vmatpush1.msra.mxu0 0.0
    %356 = vmatprep.subr.mxu0 0.0
    %357 = vmatpush1.msra.mxu0 0.0
    %358 = vmatprep.subr.mxu0 0.0
    %359 = vmatpush1.msra.mxu0 0.0
    %360 = vmatprep.subr.mxu0 0.0
    %361 = vmatpush1.msra.mxu0 0.0
    %362 = vmatprep.subr.mxu0 0.0
    %363 = vmatpush1.msra.mxu0 0.0
    %364 = vmatprep.subr.mxu0 0.0
    %365 = vmatpush1.msra.mxu0 0.0
    %366 = vmatprep.subr.mxu0 0.0
    %367 = vmatpush1.msra.mxu0 0.0
    %368 = vmatprep.subr.mxu0 0.0
    %369 = vmatpush1.msra.mxu0 0.0
    %370 = vmatprep.subr.mxu0 0.0
    %371 = vmatpush1.msra.mxu0 0.0
    %372 = vmatprep.subr.mxu0 0.0
    %373 = vmatpush1.msra.mxu0 0.0
    %374 = vmatprep.subr.mxu0 0.0
    %375 = vmatpush1.msra.mxu0 0.0
    %376 = vmatprep.subr.mxu0 0.0
    %377 = vmatpush1.msra.mxu0 0.0
    %378 = vmatprep.subr.mxu0 0.0
    %379 = vmatpush1.msra.mxu0 0.0
    %380 = vmatprep.subr.mxu0 0.0
    %381 = vmatpush1.msra.mxu0 0.0
    %382 = vmatprep.subr.mxu0 0.0
    %383 = vmatpush1.msra.mxu0 0.0
    %384 = vmatprep.subr.mxu0 0.0
    %385 = vmatpush1.msra.mxu0 0.0
    %386 = vmatprep.subr.mxu0 0.0
    %387 = vmatpush1.msra.mxu0 0.0
    %388 = vmatprep.subr.mxu0 0.0
    %389 = vmatpush1.msra.mxu0 0.0
    %390 = vmatprep.subr.mxu0 0.0
    %391 = vmatpush1.msra.mxu0 0.0
    %392 = vmatprep.subr.mxu0 0.0
    %393 = vmatpush1.msra.mxu0 0.0
    %394 = vmatprep.subr.mxu0 0.0
    %395 = vmatpush1.msra.mxu0 0.0
    %396 = vmatprep.subr.mxu0 0.0
    %397 = vmatpush1.msra.mxu0 0.0
    %398 = vmatprep.subr.mxu0 0.0
    %399 = vmatpush1.msra.mxu0 0.0
    %400 = vmatprep.subr.mxu0 0.0
    %401 = vmatpush1.msra.mxu0 0.0
    %402 = vmatprep.mubr.f32.mxu0 0.0
    %403 = vmatmul.mubr.f32.gmra.mrb[0].mxu0 %v265
    %v404 = vpop.f32.mrb[0].mxu0
    %v405 = vadd.f32 0.0, %v404
    %v406 = vpop.f32.mrb[0].mxu0
    %407 = vdwg.mxu0
    %v408 = vld [vmem:[%s3] sm:$0x1]
    %v410 = vlaneseq
    %v411 = vshrl.u32 %v410, 7
    %v412 = vsub.s32 0, %v411
    %v413 = vrot.slane %v408, %v412
    %vm415 = vcmask 195584
    %v417 = vsel %vm415, %v79, 0
    %v420 = vsel %vm415, %v80, 0
    %422 = vmatprep.subr.mxu0 0.0
    %423 = vmatpush1.msra.mxu0 %v334
    %424 = vmatprep.subr.mxu0 0.0
    %425 = vmatpush1.msra.mxu0 %v336
    %426 = vmatprep.subr.mxu0 0.0
    %427 = vmatpush1.msra.mxu0 %v405
    %428 = vmatprep.subr.mxu0 0.0
    %429 = vmatpush1.msra.mxu0 0.0
    %430 = vmatprep.subr.mxu0 0.0
    %431 = vmatpush1.msra.mxu0 0.0
    %432 = vmatprep.subr.mxu0 0.0
    %433 = vmatpush1.msra.mxu0 0.0
    %434 = vmatprep.subr.mxu0 0.0
    %435 = vmatpush1.msra.mxu0 0.0
    %436 = vmatprep.subr.mxu0 0.0
    %437 = vmatpush1.msra.mxu0 0.0
    %438 = vmatprep.subr.mxu0 0.0
    %439 = vmatpush1.msra.mxu0 0.0
    %440 = vmatprep.subr.mxu0 0.0
    %441 = vmatpush1.msra.mxu0 0.0
    %442 = vmatprep.subr.mxu0 0.0
    %443 = vmatpush1.msra.mxu0 0.0
    %444 = vmatprep.subr.mxu0 0.0
    %445 = vmatpush1.msra.mxu0 0.0
    %446 = vmatprep.subr.mxu0 0.0
    %447 = vmatpush1.msra.mxu0 0.0
    %448 = vmatprep.subr.mxu0 0.0
    %449 = vmatpush1.msra.mxu0 0.0
    %450 = vmatprep.subr.mxu0 0.0
    %451 = vmatpush1.msra.mxu0 0.0
    %452 = vmatprep.subr.mxu0 0.0
    %453 = vmatpush1.msra.mxu0 0.0
    %454 = vmatprep.subr.mxu0 0.0
    %455 = vmatpush1.msra.mxu0 0.0
    %456 = vmatprep.subr.mxu0 0.0
    %457 = vmatpush1.msra.mxu0 0.0
    %458 = vmatprep.subr.mxu0 0.0
    %459 = vmatpush1.msra.mxu0 0.0
    %460 = vmatprep.subr.mxu0 0.0
    %461 = vmatpush1.msra.mxu0 0.0
    %462 = vmatprep.subr.mxu0 0.0
    %463 = vmatpush1.msra.mxu0 0.0
    %464 = vmatprep.subr.mxu0 0.0
    %465 = vmatpush1.msra.mxu0 0.0
    %466 = vmatprep.subr.mxu0 0.0
    %467 = vmatpush1.msra.mxu0 0.0
    %468 = vmatprep.subr.mxu0 0.0
    %469 = vmatpush1.msra.mxu0 0.0
    %470 = vmatprep.subr.mxu0 0.0
    %471 = vmatpush1.msra.mxu0 0.0
    %472 = vmatprep.subr.mxu0 0.0
    %473 = vmatpush1.msra.mxu0 0.0
    %474 = vmatprep.subr.mxu0 0.0
    %475 = vmatpush1.msra.mxu0 0.0
    %476 = vmatprep.subr.mxu0 0.0
    %477 = vmatpush1.msra.mxu0 0.0
    %478 = vmatprep.subr.mxu0 0.0
    %479 = vmatpush1.msra.mxu0 0.0
    %480 = vmatprep.subr.mxu0 0.0
    %481 = vmatpush1.msra.mxu0 0.0
    %482 = vmatprep.subr.mxu0 0.0
    %483 = vmatpush1.msra.mxu0 0.0
    %484 = vmatprep.subr.mxu0 0.0
    %485 = vmatpush1.msra.mxu0 0.0
    %486 = vmatprep.mubr.f32.mxu0 0.0
    %487 = vmatmul.mubr.f32.gmra.mrb[0].mxu0 %v417
    %v488 = vpop.f32.mrb[0].mxu0
    %v489 = vadd.f32 %v413, %v488
    %v490 = vpop.f32.mrb[0].mxu0
    %491 = vmatprep.mubr.f32.mxu0 0.0
    %492 = vmatmul.mubr.f32.gmra.mrb[0].mxu0 %v420
    %v493 = vpop.f32.mrb[0].mxu0
    %v494 = vadd.f32 %v413, %v493
    %v495 = vpop.f32.mrb[0].mxu0
    %496 = vdwg.mxu0
    %v497 = vxor.u32 %v489, 2147483648
    %v498 = vxor.u32 %v494, 2147483648
    %v499 = vmul.f32 %v497, 1.442695
    %v500 = vpow.pop %v499
    %v501 = vmul.f32 %v498, 1.442695
    %v502 = vpow.pop %v501
    %v503 = vadd.f32 %v500, 1.0
    %v504 = vadd.f32 %v502, 1.0
    %v505 = vrcp.pop %v503
    %v506 = vmul.f32 1.0, %v505
    %v507 = vrcp.pop %v504
    %v508 = vmul.f32 1.0, %v507
    %v509 = vmul.f32 %v59, %v506
    %v510 = vmul.f32 %v60, %v508
    %511 = vst [vmem:[#allocation8] sm:$0xff] %v509
    %512 = vst [vmem:[#allocation8 + $0x8] sm:$0xff] %v510
    // Predicated region
    $region30: #{tpu_custom_call.1} parent=1 // pred_check
      _
    $region31: #{tpu_custom_call.1} parent=1 // pred_check_branch
      %514 = sbr.rel (0) target = $region33
    $region32: #{tpu_custom_call.1} parent=1 // pred_region
      %s516 = ssub.s32 256, 256
      %517 = vsyncadd [#allocation4], %s516
      %s518 = sshll.u32 [#allocation8], 4
      %s519 = int_to_ptr.vmem [resolvable:$true] %s518
      %524 = dma.vmem_to_hbm [thread:$0]  %s519, 256, %s4, [#allocation4], 128, 128, 8
    $region33: #{tpu_custom_call.1} parent=1 // pred_fallthru
      _
    // Predicated region
    $region34: #{tpu_custom_call.1} parent=1 // pred_check
      _
    $region35: #{tpu_custom_call.1} parent=1 // pred_check_branch
      %526 = sbr.rel (0) target = $region37
    $region36: #{tpu_custom_call.1} parent=1 // pred_region
      %527 = dma.done [#allocation4], 256
    $region37: #{tpu_custom_call.1} parent=1 // pred_fallthru
      _
    %528 = vsyncpa [#allocation3], 1
    %529 = vsyncpa [#allocation6], 1
    %530 = vsyncpa [#allocation4], 1

</llo_original>
